<compile_context>
chip_gen: v5e
topology: v5e:2x2
jax: 0.10.0
libtpu: 0.0.40
codegen_flags: <defaults>
</compile_context>

<pallas_src>
import functools

import jax
import jax.numpy as jnp
from jax.experimental import pallas as pl
from jax.experimental.pallas import tpu as pltpu

_BN_EPS = 1e-5
_LANE = 128


def _round_up(x, m):
    return (x + m - 1) // m * m


def _sublane_quantum(dtype):
    # Rows per packed sublane group: 8 for 4-byte, 16 for 2-byte, 32 for 1-byte.
    return max(8, 32 // jnp.dtype(dtype).itemsize)


# --------------------------------------------------------------------------
# Kernels
# --------------------------------------------------------------------------
def _bottleneck_single_kernel(x_ref, wt_ref, gamma_ref, beta_ref, o_ref, *,
                              n_true):
    """Small-batch fast path: whole batch resident, single matmul, two-pass var."""
    h = jnp.dot(x_ref[...], wt_ref[...], preferred_element_type=jnp.float32)
    inv_n = jnp.float32(1.0 / n_true)
    mean = jnp.sum(h, axis=0, keepdims=True) * inv_n
    centered = h - mean
    var = jnp.sum(centered * centered, axis=0, keepdims=True) * inv_n  # biased
    scale = gamma_ref[...] * jax.lax.rsqrt(var + _BN_EPS)
    y = jnp.maximum(centered * scale + beta_ref[...], 0.0)
    o_ref[...] = y.astype(o_ref.dtype)


def _bottleneck_tiled_kernel(x_ref, wt_ref, gamma_ref, beta_ref, o_ref,
                             stat0_ref, stat1_ref, *, n_true, tn):
    """Two-phase fused Linear -> BatchNorm1d(train) -> ReLU.

    grid = (phase, n_tile).  Phase 0 accumulates per-feature sum / sum-of-
    squares of h = x @ W^T (bias dropped; BN centering cancels it exactly) and
    never touches the output.  Phase 1 recomputes h per tile and applies the
    folded BN scale/shift + ReLU.
    """
    phase = pl.program_id(0)
    tile = pl.program_id(1)

    # MXU matmul in the operands' native dtype (bf16-friendly), f32 accumulate.
    # TODO(synk): for wide in_features a Gram-form phase 0 (X^T X) would cut
    # the stats-pass MXU flops; irrelevant at bottleneck-sized in_features.
    h = jnp.dot(x_ref[...], wt_ref[...], preferred_element_type=jnp.float32)

    @pl.when(phase == 0)
    def _():
        @pl.when(tile == 0)
        def _():
            stat0_ref[...] = jnp.zeros_like(stat0_ref)
            stat1_ref[...] = jnp.zeros_like(stat1_ref)
        # Ragged last tile: rows >= n_true hold unspecified pad data -> mask.
        row = tile * tn + jax.lax.broadcasted_iota(jnp.int32, h.shape, 0)
        hm = jnp.where(row < n_true, h, 0.0)
        stat0_ref[...] += jnp.sum(hm, axis=0, keepdims=True)
        stat1_ref[...] += jnp.sum(hm * hm, axis=0, keepdims=True)
        # NOTE: no o_ref store here -- the output BlockSpec pins block 0 for
        # the whole phase and it is fully rewritten by phase 1, tile 0, so no
        # HBM output traffic is generated during the stats pass.

    @pl.when(phase == 1)
    def _():
        @pl.when(tile == 0)
        def _():
            # Fold BN into per-feature scale/shift once; reuse stats scratch.
            inv_n = jnp.float32(1.0 / n_true)
            mean = stat0_ref[...] * inv_n
            var = stat1_ref[...] * inv_n - mean * mean          # biased variance
            scale = gamma_ref[...] * jax.lax.rsqrt(var + _BN_EPS)
            stat0_ref[...] = scale
            stat1_ref[...] = beta_ref[...] - mean * scale
        y = jnp.maximum(h * stat0_ref[...] + stat1_ref[...], 0.0)
        o_ref[...] = y.astype(o_ref.dtype)


# --------------------------------------------------------------------------
# Parameter packing (one-time, init path)
# --------------------------------------------------------------------------
def prepare_params(w, b, gamma, beta, compute_dtype=None):
    """Pack PyTorch parameters for the kernel.

    * transposes the (out, in) Linear weight to (in, out),
    * pads the out-feature axis to a multiple of 128 lanes (lane-dense output),
    * drops the Linear bias (train-mode BN centering cancels it exactly),
    * optionally casts the weight to a bf16 compute dtype for the MXU.
    """
    del b  # exact no-op under train-mode BatchNorm
    out_f, in_f = w.shape
    o_pad = _round_up(out_f, _LANE)
    wt = jnp.zeros((in_f, o_pad), dtype=w.dtype).at[:, :out_f].set(w.T)
    if compute_dtype is not None:
        wt = wt.astype(compute_dtype)
    gamma_p = jnp.zeros((1, o_pad), jnp.float32).at[0, :out_f].set(
        gamma.astype(jnp.float32))
    beta_p = jnp.zeros((1, o_pad), jnp.float32).at[0, :out_f].set(
        beta.astype(jnp.float32))
    return {"wt": wt, "gamma": gamma_p, "beta": beta_p}


# --------------------------------------------------------------------------
# Forward wrapper
# --------------------------------------------------------------------------
def bottleneck_relu_forward(x, wt, gamma, beta, out_features, *,
                            block_n=512, out_dtype=None):
    """ReLU(BatchNorm1d_train(Linear(x)))  — fused Pallas kernel.

    x should already be in the MXU compute dtype (e.g. bf16 when wt is bf16);
    no wrapper-side astype / padding passes over x are performed.
    """
    n, in_f = x.shape
    o_pad = wt.shape[1]
    out_dtype = jnp.dtype(out_dtype if out_dtype is not None else x.dtype)

    x_item = jnp.dtype(x.dtype).itemsize
    w_bytes = wt.size * jnp.dtype(wt.dtype).itemsize
    quantum = max(_sublane_quantum(x.dtype), _sublane_quantum(out_dtype))

    # ---- small-batch fast path: one invocation, no two-phase grid ---------
    fast_bytes = (w_bytes + n * in_f * x_item
                  + n * o_pad * (4 + out_dtype.itemsize)    # f32 h + output
                  + 4 * o_pad * 4)
    if n <= max(block_n, quantum) and fast_bytes <= 24 * 1024 * 1024:
        kernel = functools.partial(_bottleneck_single_kernel, n_true=n)
        out = pl.pallas_call(
            kernel,
            out_shape=jax.ShapeDtypeStruct((n, o_pad), out_dtype),
            grid_spec=pltpu.PrefetchScalarGridSpec(
                num_scalar_prefetch=0,
                grid=(1,),
                in_specs=[
                    pl.BlockSpec((n, in_f), lambda i: (0, 0)),      # x (whole)
                    pl.BlockSpec((in_f, o_pad), lambda i: (0, 0)),  # W^T
                    pl.BlockSpec((1, o_pad), lambda i: (0, 0)),     # gamma
                    pl.BlockSpec((1, o_pad), lambda i: (0, 0)),     # beta
                ],
                out_specs=pl.BlockSpec((n, o_pad), lambda i: (0, 0)),
            ),
            compiler_params=pltpu.CompilerParams(
                dimension_semantics=("arbitrary",),
                vmem_limit_bytes=int(min(max(2 * fast_bytes, 16 << 20),
                                         64 << 20)),
            ),
        )(x, wt, gamma, beta)
    else:
        # ---- two-phase tiled path ------------------------------------------
        tn = min(_round_up(block_n, quantum), _round_up(n, quantum))
        num_tiles = pl.cdiv(n, tn)
        kernel = functools.partial(_bottleneck_tiled_kernel, n_true=n, tn=tn)
        # Working set: resident W^T (budget x2 for pipelining), double-buffered
        # x / out tiles, stats rows.  TODO(synk): for very large weights on
        # v7x (64 MiB VMEM) add a K/N tiling grid axis for W^T.
        tiled_bytes = (2 * w_bytes + 2 * tn * in_f * x_item
                       + 2 * tn * o_pad * out_dtype.itemsize + 8 * o_pad * 4)
        out = pl.pallas_call(
            kernel,
            out_shape=jax.ShapeDtypeStruct((n, o_pad), out_dtype),
            grid_spec=pltpu.PrefetchScalarGridSpec(
                num_scalar_prefetch=0,
                grid=(2, num_tiles),                       # (phase, n_tile)
                in_specs=[
                    pl.BlockSpec((tn, in_f), lambda p, i: (i, 0)),     # x tile
                    pl.BlockSpec((in_f, o_pad), lambda p, i: (0, 0)),  # W^T
                    pl.BlockSpec((1, o_pad), lambda p, i: (0, 0)),     # gamma
                    pl.BlockSpec((1, o_pad), lambda p, i: (0, 0)),     # beta
                ],
                # Phase 0 (p=0) pins output block 0 (never written, never
                # flushed early); phase 1 (p=1) streams blocks 0..num_tiles-1.
                out_specs=pl.BlockSpec((tn, o_pad), lambda p, i: (i * p, 0)),
                scratch_shapes=[
                    pltpu.VMEM((1, o_pad), jnp.float32),   # sum(h)   -> scale
                    pltpu.VMEM((1, o_pad), jnp.float32),   # sum(h^2) -> shift
                ],
            ),
            compiler_params=pltpu.CompilerParams(
                # Both axes stay sequential: phase 1 consumes stats that phase 0
                # accumulated across ALL N tiles in core-local VMEM scratch.
                # TODO(synk): shard the tile axis over both v7x TensorCores via
                # a partial-stats + combine + apply split (or CMEM combine).
                dimension_semantics=("arbitrary", "arbitrary"),
                vmem_limit_bytes=int(min(max(2 * tiled_bytes, 16 << 20),
                                         64 << 20)),
            ),
        )(x, wt, gamma, beta)

    # Rows are never padded; slice only the padded feature columns, on the
    # narrow output dtype (or let consumers accept the lane-padded layout).
    if o_pad != out_features:
        out = out[:, :out_features]
    return out


# --------------------------------------------------------------------------
# Reference & init helpers
# --------------------------------------------------------------------------
def _reference_forward(x, params):
    """Plain-JAX reference mirroring PyTorch training-mode forward."""
    h = x @ params["w"].T + params["b"]
    mean = jnp.mean(h, axis=0, keepdims=True)
    var = jnp.mean((h - mean) ** 2, axis=0, keepdims=True)   # biased variance
    h = (h - mean) / jnp.sqrt(var + _BN_EPS)
    h = h * params["gamma"] + params["beta"]
    return jnp.maximum(h, 0.0)


def init_params(key, in_features, out_features, dtype=jnp.float32):
    """Deterministic synthetic init (shapes match the PyTorch module)."""
    k1, k2, k3, k4 = jax.random.split(key, 4)
    bound = 1.0 / jnp.sqrt(in_features)
    return {
        "w": jax.random.uniform(k1, (out_features, in_features), dtype,
                                -bound, bound),
        "b": jax.random.uniform(k2, (out_features,), dtype, -bound, bound),
        "gamma": jax.random.uniform(k3, (out_features,), dtype, 0.5, 1.5),
        "beta": 0.1 * jax.random.normal(k4, (out_features,), dtype),
    }


if __name__ == "__main__":
    batch, in_features, out_features = 72, 32, 16   # batch not a tile multiple

    key = jax.random.PRNGKey(0)
    kx, kp = jax.random.split(key)
    x = jax.random.normal(kx, (batch, in_features), jnp.float32)
    params = init_params(kp, in_features, out_features)
    ref = _reference_forward(x, params)

    prep32 = prepare_params(params["w"], params["b"],
                            params["gamma"], params["beta"])
    prep16 = prepare_params(params["w"], params["b"],
                            params["gamma"], params["beta"],
                            compute_dtype=jnp.bfloat16)
    x16 = x.astype(jnp.bfloat16)

    # ---- f32, small-batch fast path (strict check) -------------------------
    out32 = bottleneck_relu_forward(x, prep32["wt"], prep32["gamma"],
                                    prep32["beta"], out_features)
    out32 = jax.block_until_ready(out32)
    assert out32.shape == (batch, out_features)
    assert jnp.allclose(out32, ref, atol=2e-4, rtol=2e-4), (
        f"f32 fast-path max abs diff {jnp.max(jnp.abs(out32 - ref))}")

    # ---- f32, tiled two-phase path with ragged last tile -------------------
    out32_t = bottleneck_relu_forward(x, prep32["wt"], prep32["gamma"],
                                      prep32["beta"], out_features, block_n=32)
    out32_t = jax.block_until_ready(out32_t)
    assert out32_t.shape == (batch, out_features)
    assert jnp.allclose(out32_t, ref, atol=5e-4, rtol=5e-4), (
        f"f32 tiled max abs diff {jnp.max(jnp.abs(out32_t - ref))}")

    # ---- bf16 operands / bf16 output, fast path ----------------------------
    out16 = bottleneck_relu_forward(x16, prep16["wt"], prep16["gamma"],
                                    prep16["beta"], out_features)
    out16 = jax.block_until_ready(out16)
    assert out16.shape == (batch, out_features)
    assert out16.dtype == jnp.bfloat16
    assert bool(jnp.max(jnp.abs(out16.astype(jnp.float32) - ref)) < 0.25), (
        f"bf16 fast-path max abs diff "
        f"{jnp.max(jnp.abs(out16.astype(jnp.float32) - ref))}")

    # ---- bf16 operands / bf16 output, tiled path ----------------------------
    out16_t = bottleneck_relu_forward(x16, prep16["wt"], prep16["gamma"],
                                      prep16["beta"], out_features, block_n=32)
    out16_t = jax.block_until_ready(out16_t)
    assert out16_t.shape == (batch, out_features)
    assert bool(jnp.max(jnp.abs(out16_t.astype(jnp.float32) - ref)) < 0.25), (
        f"bf16 tiled max abs diff "
        f"{jnp.max(jnp.abs(out16_t.astype(jnp.float32) - ref))}")

    print("KERNEL_OK")
</pallas_src>

<mosaic_0001>
module attributes {stable_mosaic.version = 11 : i64} {
  func.func @_bottleneck_single_kernel(%arg0: i32, %arg1: memref<72x32xf32, #tpu.memory_space<vmem>>, %arg2: memref<32x128xf32, #tpu.memory_space<vmem>>, %arg3: memref<1x128xf32, #tpu.memory_space<vmem>>, %arg4: memref<1x128xf32, #tpu.memory_space<vmem>>, %arg5: memref<72x128xf32, #tpu.memory_space<vmem>>) attributes {dimension_semantics = [#tpu.dimension_semantics<arbitrary>], iteration_bounds = array<i64: 1>, scalar_prefetch = 0 : i64, scratch_operands = 0 : i64, tpu.core_type = #tpu.core_type<tc>, window_params = [{pipeline_mode = #tpu.pipeline_mode<synchronous>, transform_indices = @transform_0, window_bounds = array<i64: 72, 32>}, {pipeline_mode = #tpu.pipeline_mode<synchronous>, transform_indices = @transform_1, window_bounds = array<i64: 32, 128>}, {pipeline_mode = #tpu.pipeline_mode<synchronous>, transform_indices = @transform_2, window_bounds = array<i64: 1, 128>}, {pipeline_mode = #tpu.pipeline_mode<synchronous>, transform_indices = @transform_3, window_bounds = array<i64: 1, 128>}, {pipeline_mode = #tpu.pipeline_mode<synchronous>, transform_indices = @transform_4, window_bounds = array<i64: 72, 128>}]} {
    %c0 = arith.constant 0 : index
    %c0_0 = arith.constant 0 : index
    %0 = vector.load %arg1[%c0, %c0_0] : memref<72x32xf32, #tpu.memory_space<vmem>>, vector<72x32xf32>
    %c0_1 = arith.constant 0 : index
    %c0_2 = arith.constant 0 : index
    %1 = vector.load %arg2[%c0_1, %c0_2] : memref<32x128xf32, #tpu.memory_space<vmem>>, vector<32x128xf32>
    %cst = arith.constant dense<0.000000e+00> : vector<72x128xf32>
    %2 = tpu.matmul %0, %1, %cst {dimension_numbers = #tpu.dot_dimension_numbers<[1], [0], [0], [1], [0, 0, 1, 1], [], []>} : vector<72x32xf32>, vector<32x128xf32>, vector<72x128xf32> -> vector<72x128xf32>
    %cst_3 = arith.constant dense<0.000000e+00> : vector<128xf32>
    %3 = vector.multi_reduction <add>, %2, %cst_3 [0] : vector<72x128xf32> to vector<128xf32>
    %4 = vector.shape_cast %3 : vector<128xf32> to vector<1x128xf32>
    %cst_4 = arith.constant 0.013888889 : f32
    %5 = vector.broadcast %cst_4 : f32 to vector<1x128xf32>
    %6 = arith.mulf %4, %5 : vector<1x128xf32>
    %7 = vector.broadcast %6 : vector<1x128xf32> to vector<72x128xf32>
    %8 = arith.subf %2, %7 : vector<72x128xf32>
    %9 = arith.mulf %8, %8 : vector<72x128xf32>
    %cst_5 = arith.constant dense<0.000000e+00> : vector<128xf32>
    %10 = vector.multi_reduction <add>, %9, %cst_5 [0] : vector<72x128xf32> to vector<128xf32>
    %11 = vector.shape_cast %10 : vector<128xf32> to vector<1x128xf32>
    %cst_6 = arith.constant 0.013888889 : f32
    %12 = vector.broadcast %cst_6 : f32 to vector<1x128xf32>
    %13 = arith.mulf %11, %12 : vector<1x128xf32>
    %c0_7 = arith.constant 0 : index
    %c0_8 = arith.constant 0 : index
    %14 = vector.load %arg3[%c0_7, %c0_8] : memref<1x128xf32, #tpu.memory_space<vmem>>, vector<1x128xf32>
    %cst_9 = arith.constant 9.99999974E-6 : f32
    %15 = vector.broadcast %cst_9 : f32 to vector<1x128xf32>
    %16 = arith.addf %13, %15 : vector<1x128xf32>
    %17 = math.rsqrt %16 : vector<1x128xf32>
    %18 = arith.mulf %14, %17 : vector<1x128xf32>
    %19 = vector.broadcast %18 : vector<1x128xf32> to vector<72x128xf32>
    %20 = arith.mulf %8, %19 : vector<72x128xf32>
    %c0_10 = arith.constant 0 : index
    %c0_11 = arith.constant 0 : index
    %21 = vector.load %arg4[%c0_10, %c0_11] : memref<1x128xf32, #tpu.memory_space<vmem>>, vector<1x128xf32>
    %22 = vector.broadcast %21 : vector<1x128xf32> to vector<72x128xf32>
    %23 = arith.addf %20, %22 : vector<72x128xf32>
    %cst_12 = arith.constant 0.000000e+00 : f32
    %24 = vector.broadcast %cst_12 : f32 to vector<72x128xf32>
    %25 = arith.maximumf %23, %24 : vector<72x128xf32>
    %c0_13 = arith.constant 0 : index
    %c0_14 = arith.constant 0 : index
    %26 = vector.load %arg5[%c0_13, %c0_14] : memref<72x128xf32, #tpu.memory_space<vmem>>, vector<72x128xf32>
    tpu.vector_store %arg5[%c0_13, %c0_14], %25 {strides = array<i32>} : memref<72x128xf32, #tpu.memory_space<vmem>>, vector<72x128xf32>,
    return
  }
  func.func @transform_0(%arg0: i32) -> (i32, i32) {
    %c0_i32 = arith.constant 0 : i32
    %c0_i32_0 = arith.constant 0 : i32
    %c0_i32_1 = arith.constant 0 : i32
    return %c0_i32, %c0_i32_0 : i32, i32
  }
  func.func @transform_1(%arg0: i32) -> (i32, i32) {
    %c0_i32 = arith.constant 0 : i32
    %c0_i32_0 = arith.constant 0 : i32
    %c0_i32_1 = arith.constant 0 : i32
    return %c0_i32, %c0_i32_0 : i32, i32
  }
  func.func @transform_2(%arg0: i32) -> (i32, i32) {
    %c0_i32 = arith.constant 0 : i32
    %c0_i32_0 = arith.constant 0 : i32
    %c0_i32_1 = arith.constant 0 : i32
    return %c0_i32, %c0_i32_0 : i32, i32
  }
  func.func @transform_3(%arg0: i32) -> (i32, i32) {
    %c0_i32 = arith.constant 0 : i32
    %c0_i32_0 = arith.constant 0 : i32
    %c0_i32_1 = arith.constant 0 : i32
    return %c0_i32, %c0_i32_0 : i32, i32
  }
  func.func @transform_4(%arg0: i32) -> (i32, i32) {
    %c0_i32 = arith.constant 0 : i32
    %c0_i32_0 = arith.constant 0 : i32
    %c0_i32_1 = arith.constant 0 : i32
    return %c0_i32, %c0_i32_0 : i32, i32
  }
}

</mosaic_0001>

<llo_original>
// kernel: tpu_custom_call.1
$region0: #{tpu_custom_call.1}
  #allocation0 [shape = 'u32[]', space=smem, size = 0x4, offset = 0x4, fixed_abs, tag = 'smem constant byte address 0x4 - core index']
  #allocation1 [shape = 'u32[72,128]{1,0:T(1,128)}', space=vmem, size = 0x9000, scoped, tag = 'internal scratch']
  %s0 = inlined_call_operand.vmem [shape: f32[72,32], index: 0, kind: input, shape index: {}]
  %s1 = inlined_call_operand.vmem [shape: f32[32,128], index: 1, kind: input, shape index: {}]
  %s2 = inlined_call_operand.vmem [shape: f32[1,128], index: 2, kind: input, shape index: {}]
  %s3 = inlined_call_operand.vmem [shape: f32[1,128], index: 3, kind: input, shape index: {}]
  %s4 = inlined_call_operand.hbm [shape: f32[72,128], index: 4, kind: output, shape index: {}]
  %s5 = sld [smem:[#allocation0]]
  $region26: #{tpu_custom_call.1} parent=0
    _
  %s7 = ssub.s32 1, %s5
  %s8 = scalar_select 0, %s7, %s5
  $region1: #{tpu_custom_call.1} parent=0
    #allocation2 [shape = 'u8[36864]{0}', space=vmem, size = 0x9000, scoped, tag = 'output window, operand 0, single buffered']
    #allocation3 [shape = 's32[1]{0}', space=sflag, size = 0x4, scoped, tag = 'scoped memory for tpu_custom_call.1']
    %9 = vsyncpa [#allocation3], 0
    // Predicated region
    $region2: #{tpu_custom_call.1} parent=1 // pred_check
      _
    $region3: #{tpu_custom_call.1} parent=1 // pred_check_branch
      %11 = sbr.rel (0) target = $region5
    $region4: #{tpu_custom_call.1} parent=1 // pred_region
      _
    $region5: #{tpu_custom_call.1} parent=1 // pred_fallthru
      _
    // Predicated region
    $region6: #{tpu_custom_call.1} parent=1 // pred_check
      _
    $region7: #{tpu_custom_call.1} parent=1 // pred_check_branch
      %13 = sbr.rel (0) target = $region9
    $region8: #{tpu_custom_call.1} parent=1 // pred_region
      _
    $region9: #{tpu_custom_call.1} parent=1 // pred_fallthru
      _
    // Predicated region
    $region10: #{tpu_custom_call.1} parent=1 // pred_check
      _
    $region11: #{tpu_custom_call.1} parent=1 // pred_check_branch
      %15 = sbr.rel (0) target = $region13
    $region12: #{tpu_custom_call.1} parent=1 // pred_region
      _
    $region13: #{tpu_custom_call.1} parent=1 // pred_fallthru
      _
    // Predicated region
    $region14: #{tpu_custom_call.1} parent=1 // pred_check
      _
    $region15: #{tpu_custom_call.1} parent=1 // pred_check_branch
      %17 = sbr.rel (0) target = $region17
    $region16: #{tpu_custom_call.1} parent=1 // pred_region
      _
    $region17: #{tpu_custom_call.1} parent=1 // pred_fallthru
      _
    %v18 = vld [vmem:[%s0] sm:$0xff]
    %v19 = vld [vmem:[%s0 + $0x8] sm:$0xff]
    %v20 = vld [vmem:[%s0 + $0x10] sm:$0xff]
    %v21 = vld [vmem:[%s0 + $0x18] sm:$0xff]
    %v22 = vld [vmem:[%s0 + $0x20] sm:$0xff]
    %v23 = vld [vmem:[%s0 + $0x28] sm:$0xff]
    %v24 = vld [vmem:[%s0 + $0x30] sm:$0xff]
    %v25 = vld [vmem:[%s0 + $0x38] sm:$0xff]
    %v26 = vld [vmem:[%s0 + $0x40] sm:$0xff]
    %v27 = vld [vmem:[%s1] sm:$0xff]
    %v28 = vld [vmem:[%s1 + $0x8] sm:$0xff]
    %v29 = vld [vmem:[%s1 + $0x10] sm:$0xff]
    %v30 = vld [vmem:[%s1 + $0x18] sm:$0xff]
    %vm31 = vcmask 261120
    %v33 = vsel %vm31, %v18, 0
    %v36 = vsel %vm31, %v19, 0
    %v39 = vsel %vm31, %v20, 0
    %v42 = vsel %vm31, %v21, 0
    %v45 = vsel %vm31, %v22, 0
    %v48 = vsel %vm31, %v23, 0
    %v51 = vsel %vm31, %v24, 0
    %v54 = vsel %vm31, %v25, 0
    %v57 = vsel %vm31, %v26, 0
    %59 = vmatpush.msra.mxu0 0.0
    %60 = vmatpush.msra.mxu0 0.0
    %61 = vmatpush.msra.mxu0 0.0
    %62 = vmatpush.msra.mxu0 0.0
    %63 = vmatpush.msra.mxu0 0.0
    %64 = vmatpush.msra.mxu0 0.0
    %65 = vmatpush.msra.mxu0 0.0
    %66 = vmatpush.msra.mxu0 0.0
    %67 = vmatpush.msra.mxu0 0.0
    %68 = vmatpush.msra.mxu0 0.0
    %69 = vmatpush.msra.mxu0 0.0
    %70 = vmatpush.msra.mxu0 0.0
    %71 = vmatpush.msra.mxu0 %v30
    %72 = vmatpush.msra.mxu0 %v29
    %73 = vmatpush.msra.mxu0 %v28
    %74 = vmatpush.msra.mxu0 %v27
    %75 = vmatmul.f32.gmra.mxu0 %v33
    %v76 = vpop.f32.mrf.mxu0
    %v77 = vadd.f32 0.0, %v76
    %78 = vmatmul.f32.gmra.mxu0 %v36
    %v79 = vpop.f32.mrf.mxu0
    %v80 = vadd.f32 0.0, %v79
    %81 = vmatmul.f32.gmra.mxu0 %v39
    %v82 = vpop.f32.mrf.mxu0
    %v83 = vadd.f32 0.0, %v82
    %84 = vmatmul.f32.gmra.mxu0 %v42
    %v85 = vpop.f32.mrf.mxu0
    %v86 = vadd.f32 0.0, %v85
    %87 = vmatmul.f32.gmra.mxu0 %v45
    %v88 = vpop.f32.mrf.mxu0
    %v89 = vadd.f32 0.0, %v88
    %90 = vmatmul.f32.gmra.mxu0 %v48
    %v91 = vpop.f32.mrf.mxu0
    %v92 = vadd.f32 0.0, %v91
    %93 = vmatmul.f32.gmra.mxu0 %v51
    %v94 = vpop.f32.mrf.mxu0
    %v95 = vadd.f32 0.0, %v94
    %96 = vmatmul.f32.gmra.mxu0 %v54
    %v97 = vpop.f32.mrf.mxu0
    %v98 = vadd.f32 0.0, %v97
    %99 = vmatmul.f32.gmra.mxu0 %v57
    %v100 = vpop.f32.mrf.mxu0
    %v101 = vadd.f32 0.0, %v100
    %102 = vdwg.mxu0
    %v103 = vadd.f32 %v77, %v80
    %v104 = vadd.f32 %v103, %v83
    %v105 = vadd.f32 %v104, %v86
    %v106 = vadd.f32 %v105, %v89
    %v107 = vadd.f32 %v106, %v92
    %v108 = vadd.f32 %v107, %v95
    %v109 = vadd.f32 %v108, %v98
    %v110 = vadd.f32 %v109, %v101
    %v111 = vrot.slane %v110, 4
    %v112 = vadd.f32 %v110, %v111
    %v113 = vrot.slane %v112, 2
    %v114 = vadd.f32 %v112, %v113
    %v115 = vrot.slane %v114, 1
    %v116 = vadd.f32 %v114, %v115
    %v117 = vmul.f32 %v116, 0.013888889
    %v118 = vsub.f32 %v77, %v117
    %v119 = vsub.f32 %v80, %v117
    %v120 = vsub.f32 %v83, %v117
    %v121 = vsub.f32 %v86, %v117
    %v122 = vsub.f32 %v89, %v117
    %v123 = vsub.f32 %v92, %v117
    %v124 = vsub.f32 %v95, %v117
    %v125 = vsub.f32 %v98, %v117
    %v126 = vsub.f32 %v101, %v117
    %v127 = vmul.f32 %v118, %v118
    %v128 = vmul.f32 %v119, %v119
    %v129 = vmul.f32 %v120, %v120
    %v130 = vmul.f32 %v121, %v121
    %v131 = vmul.f32 %v122, %v122
    %v132 = vmul.f32 %v123, %v123
    %v133 = vmul.f32 %v124, %v124
    %v134 = vmul.f32 %v125, %v125
    %v135 = vmul.f32 %v126, %v126
    %v136 = vadd.f32 %v127, %v128
    %v137 = vadd.f32 %v136, %v129
    %v138 = vadd.f32 %v137, %v130
    %v139 = vadd.f32 %v138, %v131
    %v140 = vadd.f32 %v139, %v132
    %v141 = vadd.f32 %v140, %v133
    %v142 = vadd.f32 %v141, %v134
    %v143 = vadd.f32 %v142, %v135
    %v144 = vrot.slane %v143, 4
    %v145 = vadd.f32 %v143, %v144
    %v146 = vrot.slane %v145, 2
    %v147 = vadd.f32 %v145, %v146
    %v148 = vrot.slane %v147, 1
    %v149 = vadd.f32 %v147, %v148
    %v150 = vmul.f32 %v149, 0.013888889
    %v151 = vld [vmem:[%s2] sm:$0x1]
    %v152 = vadd.f32 %v150, 1e-05
    %v153 = vrsqrt.pop %v152
    %v154 = vmul.f32 %v153, %v152
    %v155 = vmul.f32 %v154, %v153
    %v156 = vmul.f32 0.5, %v155
    %v157 = vsub.f32 1.5, %v156
    %v158 = vmul.f32 %v153, %v157
    %vm159 = vweird.f32 %v152
    %vm160 = vweird.f32 %v153
    %vm161 = vmor %vm159, %vm160
    %v162 = vsel %vm161, %v153, %v158
    %v163 = vmul.f32 %v151, %v162
    %v165 = vperm.slane %v163, 0
    %v167 = vmul.f32 %v118, %v165
    %v168 = vmul.f32 %v119, %v165
    %v169 = vmul.f32 %v120, %v165
    %v170 = vmul.f32 %v121, %v165
    %v171 = vmul.f32 %v122, %v165
    %v172 = vmul.f32 %v123, %v165
    %v173 = vmul.f32 %v124, %v165
    %v174 = vmul.f32 %v125, %v165
    %v175 = vmul.f32 %v126, %v165
    %v176 = vld [vmem:[%s3] sm:$0x1]
    %v178 = vperm.slane %v176, 0
    %v180 = vadd.f32 %v167, %v178
    %v181 = vadd.f32 %v168, %v178
    %v182 = vadd.f32 %v169, %v178
    %v183 = vadd.f32 %v170, %v178
    %v184 = vadd.f32 %v171, %v178
    %v185 = vadd.f32 %v172, %v178
    %v186 = vadd.f32 %v173, %v178
    %v187 = vadd.f32 %v174, %v178
    %v188 = vadd.f32 %v175, %v178
    %v189 = vmax.f32 %v180, 0.0
    %v190 = vmax.f32 %v181, 0.0
    %v191 = vmax.f32 %v182, 0.0
    %v192 = vmax.f32 %v183, 0.0
    %v193 = vmax.f32 %v184, 0.0
    %v194 = vmax.f32 %v185, 0.0
    %v195 = vmax.f32 %v186, 0.0
    %v196 = vmax.f32 %v187, 0.0
    %v197 = vmax.f32 %v188, 0.0
    %198 = vst [vmem:[#allocation2] sm:$0xff] %v189
    %199 = vst [vmem:[#allocation2 + $0x8] sm:$0xff] %v190
    %200 = vst [vmem:[#allocation2 + $0x10] sm:$0xff] %v191
    %201 = vst [vmem:[#allocation2 + $0x18] sm:$0xff] %v192
    %202 = vst [vmem:[#allocation2 + $0x20] sm:$0xff] %v193
    %203 = vst [vmem:[#allocation2 + $0x28] sm:$0xff] %v194
    %204 = vst [vmem:[#allocation2 + $0x30] sm:$0xff] %v195
    %205 = vst [vmem:[#allocation2 + $0x38] sm:$0xff] %v196
    %206 = vst [vmem:[#allocation2 + $0x40] sm:$0xff] %v197
    // Predicated region
    $region18: #{tpu_custom_call.1} parent=1 // pred_check
      _
    $region19: #{tpu_custom_call.1} parent=1 // pred_check_branch
      %208 = sbr.rel (0) target = $region21
    $region20: #{tpu_custom_call.1} parent=1 // pred_region
      %210 = vsyncadd [#allocation3], 0
      %s211 = sshll.u32 [#allocation2], 4
      %s212 = int_to_ptr.vmem [resolvable:$true] %s211
      %s213 = sshll.u32 %s4, 4
      %s214 = int_to_ptr.hbm [resolvable:$true] %s213
      %219 = dma.vmem_to_hbm [thread:$0]  %s212, 1152, %s214, [#allocation3], 128, 128, 8
    $region21: #{tpu_custom_call.1} parent=1 // pred_fallthru
      _
    // Predicated region
    $region22: #{tpu_custom_call.1} parent=1 // pred_check
      _
    $region23: #{tpu_custom_call.1} parent=1 // pred_check_branch
      %221 = sbr.rel (0) target = $region25
    $region24: #{tpu_custom_call.1} parent=1 // pred_region
      %223 = dma.done [#allocation3], 1152
    $region25: #{tpu_custom_call.1} parent=1 // pred_fallthru
      _
    %224 = vsyncpa [#allocation3], 1

</llo_original>
